<compile_context>
chip_gen: v7x
topology: tpu7x:2x2x1
jax: 0.10.0
libtpu: 0.0.40
codegen_flags: <defaults>
</compile_context>

<pallas_src>
import jax
import jax.numpy as jnp
from jax import lax
from jax.experimental import pallas as pl
from jax.experimental.pallas import tpu as pltpu


def _round_up(x, m):
    return ((x + m - 1) // m) * m


def _patch_embed_kernel(x_ref, w_ref, bp_ref, o_ref):
    # x_ref: [TM, Kp], w_ref: [Np, Kp] (contract K of both -> [TM, Np]),
    # bp_ref: [1, Np] (bias + positions), o_ref: [TM, Np].
    acc = lax.dot_general(
        x_ref[...], w_ref[...],
        dimension_numbers=(((1,), (1,)), ((), ())),
        preferred_element_type=jnp.float32,
    )
    o_ref[...] = (acc + bp_ref[...]).astype(o_ref.dtype)


def patch_embedding(x, weight, bias, positions, *, tm=512):
    """x: [B, S, K]; weight: [N, K] (PyTorch Linear layout); bias, positions: [N]."""
    B, S, K = x.shape
    N = weight.shape[0]
    M = B * S

    # Lane-dense padding: output lanes to a multiple of 128; K padded only when large
    # (a full-extent K block is legal and cheap for the small K of patch embeddings).
    Kp = _round_up(K, 128) if K > 128 else K
    Np = _round_up(N, 128)

    # Sublane-aligned row tile (16 covers both f32 and bf16), shrunk so the
    # double-buffered working set stays well under v7x's 64 MiB VMEM.
    sub = 16
    TM = _round_up(min(tm, _round_up(M, sub)), sub)

    def vmem_bytes(tm_):
        itm = 4  # conservative (f32)
        return (2 * tm_ * Kp + 2 * tm_ * Np + 2 * Np * Kp + 2 * Np) * itm

    budget = 48 << 20
    while TM > sub and vmem_bytes(TM) > budget:
        TM = _round_up(TM // 2, sub)

    M_pad = _round_up(M, TM)

    # One-time glue: flatten + zero-pad. Weight stays in [N, K] layout (no transpose).
    x2 = jnp.pad(x.reshape(M, K), ((0, M_pad - M), (0, Kp - K)))
    w2 = jnp.pad(weight, ((0, Np - N), (0, Kp - K)))
    bp = jnp.pad((bias + positions).astype(jnp.float32), (0, Np - N)).reshape(1, Np)

    vmem_limit = int(min(56 << 20, max(32 << 20, vmem_bytes(TM) + (8 << 20))))

    out = pl.pallas_call(
        _patch_embed_kernel,
        out_shape=jax.ShapeDtypeStruct((M_pad, Np), x.dtype),
        grid=(M_pad // TM,),
        in_specs=[
            pl.BlockSpec((TM, Kp), lambda i: (i, 0)),   # streamed input rows
            pl.BlockSpec((Np, Kp), lambda i: (0, 0)),   # weight (resident across grid)
            pl.BlockSpec((1, Np), lambda i: (0, 0)),    # folded bias+positions (resident)
        ],
        out_specs=pl.BlockSpec((TM, Np), lambda i: (i, 0)),
        compiler_params=pltpu.CompilerParams(
            dimension_semantics=("parallel",),          # shard M across TCs on v7x
            vmem_limit_bytes=vmem_limit,
        ),
    )(x2, w2, bp)

    return out[:M, :N].reshape(B, S, N)


if __name__ == "__main__":
    # Small shapes consistent with the forward: x [..., input_size]
    batch, seq, input_size, hidden_size = 2, 8, 4, 32

    key = jax.random.PRNGKey(0)
    kx, kw, kb, kp = jax.random.split(key, 4)

    x = jax.random.normal(kx, (batch, seq, input_size), dtype=jnp.float32)
    # PyTorch Linear: weight [out, in], bias [out]
    weight = jax.random.normal(kw, (hidden_size, input_size), dtype=jnp.float32) * 0.1
    bias = jax.random.normal(kb, (hidden_size,), dtype=jnp.float32) * 0.1
    positions = jax.random.normal(kp, (hidden_size,), dtype=jnp.float32)

    out = patch_embedding(x, weight, bias, positions)
    out = jax.block_until_ready(out)

    # Pure-JAX reference check
    ref = x @ weight.T + bias + positions
    assert out.shape == (batch, seq, hidden_size)
    assert jnp.allclose(out, ref, atol=1e-5, rtol=1e-5)

    print("KERNEL_OK")
</pallas_src>

<mosaic_0001>
module attributes {stable_mosaic.version = 11 : i64} {
  func.func @_patch_embed_kernel(%arg0: i32, %arg1: memref<16x4xf32, #tpu.memory_space<vmem>>, %arg2: memref<128x4xf32, #tpu.memory_space<vmem>>, %arg3: memref<1x128xf32, #tpu.memory_space<vmem>>, %arg4: memref<16x128xf32, #tpu.memory_space<vmem>>) attributes {dimension_semantics = [#tpu.dimension_semantics<parallel>], iteration_bounds = array<i64: 1>, scalar_prefetch = 0 : i64, scratch_operands = 0 : i64, tpu.core_type = #tpu.core_type<tc>, window_params = [{transform_indices = @transform_0, window_bounds = array<i64: 16, 4>}, {pipeline_mode = #tpu.pipeline_mode<synchronous>, transform_indices = @transform_1, window_bounds = array<i64: 128, 4>}, {pipeline_mode = #tpu.pipeline_mode<synchronous>, transform_indices = @transform_2, window_bounds = array<i64: 1, 128>}, {transform_indices = @transform_3, window_bounds = array<i64: 16, 128>}]} {
    %c0 = arith.constant 0 : index
    %c0_0 = arith.constant 0 : index
    %0 = vector.load %arg1[%c0, %c0_0] : memref<16x4xf32, #tpu.memory_space<vmem>>, vector<16x4xf32>
    %c0_1 = arith.constant 0 : index
    %c0_2 = arith.constant 0 : index
    %1 = vector.load %arg2[%c0_1, %c0_2] : memref<128x4xf32, #tpu.memory_space<vmem>>, vector<128x4xf32>
    %cst = arith.constant dense<0.000000e+00> : vector<16x128xf32>
    %2 = tpu.matmul %0, %1, %cst {dimension_numbers = #tpu.dot_dimension_numbers<[1], [1], [0], [0], [0, 0, 1, 0], [], []>} : vector<16x4xf32>, vector<128x4xf32>, vector<16x128xf32> -> vector<16x128xf32>
    %c0_3 = arith.constant 0 : index
    %c0_4 = arith.constant 0 : index
    %3 = vector.load %arg3[%c0_3, %c0_4] : memref<1x128xf32, #tpu.memory_space<vmem>>, vector<1x128xf32>
    %4 = vector.broadcast %3 : vector<1x128xf32> to vector<16x128xf32>
    %5 = arith.addf %2, %4 : vector<16x128xf32>
    %c0_5 = arith.constant 0 : index
    %c0_6 = arith.constant 0 : index
    %6 = vector.load %arg4[%c0_5, %c0_6] : memref<16x128xf32, #tpu.memory_space<vmem>>, vector<16x128xf32>
    tpu.vector_store %arg4[%c0_5, %c0_6], %5 {strides = array<i32>} : memref<16x128xf32, #tpu.memory_space<vmem>>, vector<16x128xf32>,
    return
  }
  func.func @transform_0(%arg0: i32) -> (i32, i32) {
    %c0_i32 = arith.constant 0 : i32
    %c0_i32_0 = arith.constant 0 : i32
    return %arg0, %c0_i32 : i32, i32
  }
  func.func @transform_1(%arg0: i32) -> (i32, i32) {
    %c0_i32 = arith.constant 0 : i32
    %c0_i32_0 = arith.constant 0 : i32
    %c0_i32_1 = arith.constant 0 : i32
    return %c0_i32, %c0_i32_0 : i32, i32
  }
  func.func @transform_2(%arg0: i32) -> (i32, i32) {
    %c0_i32 = arith.constant 0 : i32
    %c0_i32_0 = arith.constant 0 : i32
    %c0_i32_1 = arith.constant 0 : i32
    return %c0_i32, %c0_i32_0 : i32, i32
  }
  func.func @transform_3(%arg0: i32) -> (i32, i32) {
    %c0_i32 = arith.constant 0 : i32
    %c0_i32_0 = arith.constant 0 : i32
    return %arg0, %c0_i32 : i32, i32
  }
}

</mosaic_0001>

<llo_original>
// kernel: tpu_custom_call.1
$region0: #{tpu_custom_call.1}
  #allocation0 [shape = 'u32[]', space=smem, size = 0x4, offset = 0x4, fixed_abs, tag = 'smem constant byte address 0x4 - core index']
  #allocation1 [shape = 'u32[144,128]{1,0:T(1,128)}', space=vmem, size = 0x12000, scoped, tag = 'internal scratch']
  %s0 = inlined_call_operand.vmem [shape: f32[16,4], index: 0, kind: input, shape index: {}]
  %s1 = inlined_call_operand.vmem [shape: f32[128,4], index: 1, kind: input, shape index: {}]
  %s2 = inlined_call_operand.vmem [shape: f32[1,128], index: 2, kind: input, shape index: {}]
  %s3 = inlined_call_operand.hbm [shape: f32[16,128], index: 3, kind: output, shape index: {}]
  %s4 = sld [smem:[#allocation0]]
  $region22: #{tpu_custom_call.1} parent=0
    _
  %s6 = ssub.s32 1, %s4
  %s7 = scalar_select 0, %s6, %s4
  $region1: #{tpu_custom_call.1} parent=0
    #allocation2 [shape = 'u8[8192]{0}', space=vmem, size = 0x2000, scoped, tag = 'output window, operand 0, single buffered']
    #allocation3 [shape = 's32[1]{0}', space=sflag, size = 0x4, scoped, tag = 'scoped memory for tpu_custom_call.1']
    %8 = vsyncpa [#allocation3], 0
    // Predicated region
    $region2: #{tpu_custom_call.1} parent=1 // pred_check
      _
    $region3: #{tpu_custom_call.1} parent=1 // pred_check_branch
      %10 = sbr.rel (0) target = $region5
    $region4: #{tpu_custom_call.1} parent=1 // pred_region
      _
    $region5: #{tpu_custom_call.1} parent=1 // pred_fallthru
      _
    // Predicated region
    $region6: #{tpu_custom_call.1} parent=1 // pred_check
      _
    $region7: #{tpu_custom_call.1} parent=1 // pred_check_branch
      %12 = sbr.rel (0) target = $region9
    $region8: #{tpu_custom_call.1} parent=1 // pred_region
      _
    $region9: #{tpu_custom_call.1} parent=1 // pred_fallthru
      _
    // Predicated region
    $region10: #{tpu_custom_call.1} parent=1 // pred_check
      _
    $region11: #{tpu_custom_call.1} parent=1 // pred_check_branch
      %14 = sbr.rel (0) target = $region13
    $region12: #{tpu_custom_call.1} parent=1 // pred_region
      _
    $region13: #{tpu_custom_call.1} parent=1 // pred_fallthru
      _
    %v15 = vld [vmem:[%s0] sm:$0xff]
    %v16 = vld [vmem:[%s0 + $0x8] sm:$0xff]
    %v17 = vld [vmem:[%s1] sm:$0xff]
    %v18 = vld [vmem:[%s1 + $0x8] sm:$0xff]
    %v19 = vld [vmem:[%s1 + $0x10] sm:$0xff]
    %v20 = vld [vmem:[%s1 + $0x18] sm:$0xff]
    %v21 = vld [vmem:[%s1 + $0x20] sm:$0xff]
    %v22 = vld [vmem:[%s1 + $0x28] sm:$0xff]
    %v23 = vld [vmem:[%s1 + $0x30] sm:$0xff]
    %v24 = vld [vmem:[%s1 + $0x38] sm:$0xff]
    %v25 = vld [vmem:[%s1 + $0x40] sm:$0xff]
    %v26 = vld [vmem:[%s1 + $0x48] sm:$0xff]
    %v27 = vld [vmem:[%s1 + $0x50] sm:$0xff]
    %v28 = vld [vmem:[%s1 + $0x58] sm:$0xff]
    %v29 = vld [vmem:[%s1 + $0x60] sm:$0xff]
    %v30 = vld [vmem:[%s1 + $0x68] sm:$0xff]
    %v31 = vld [vmem:[%s1 + $0x70] sm:$0xff]
    %v32 = vld [vmem:[%s1 + $0x78] sm:$0xff]
    %v33 = vld [vmem:[%s2] sm:$0x1]
    %v35 = vlaneseq
    %v36 = vshrl.u32 %v35, 7
    %v37 = vsub.s32 0, %v36
    %v38 = vrot.slane %v33, %v37
    %vm40 = vcmask 31744
    %v42 = vsel %vm40, %v15, 0
    %v45 = vsel %vm40, %v16, 0
    %v48 = vsel %vm40, %v17, 0
    %v51 = vsel %vm40, %v18, 0
    %v54 = vsel %vm40, %v19, 0
    %v57 = vsel %vm40, %v20, 0
    %v60 = vsel %vm40, %v21, 0
    %v63 = vsel %vm40, %v22, 0
    %v66 = vsel %vm40, %v23, 0
    %v69 = vsel %vm40, %v24, 0
    %v72 = vsel %vm40, %v25, 0
    %v75 = vsel %vm40, %v26, 0
    %v78 = vsel %vm40, %v27, 0
    %v81 = vsel %vm40, %v28, 0
    %v84 = vsel %vm40, %v29, 0
    %v87 = vsel %vm40, %v30, 0
    %v90 = vsel %vm40, %v31, 0
    %v93 = vsel %vm40, %v32, 0
    %95 = vmatprep.subr.mxu0 0.0
    %96 = vmatpush1.xpose.msra.mxu0 %v48
    %97 = vmatprep.subr.mxu0 0.0
    %98 = vmatpush1.xpose.msra.mxu0 %v51
    %99 = vmatprep.subr.mxu0 0.0
    %100 = vmatpush1.xpose.msra.mxu0 %v54
    %101 = vmatprep.subr.mxu0 0.0
    %102 = vmatpush1.xpose.msra.mxu0 %v57
    %103 = vmatprep.subr.mxu0 0.0
    %104 = vmatpush1.xpose.msra.mxu0 %v60
    %105 = vmatprep.subr.mxu0 0.0
    %106 = vmatpush1.xpose.msra.mxu0 %v63
    %107 = vmatprep.subr.mxu0 0.0
    %108 = vmatpush1.xpose.msra.mxu0 %v66
    %109 = vmatprep.subr.mxu0 0.0
    %110 = vmatpush1.xpose.msra.mxu0 %v69
    %111 = vmatprep.subr.mxu0 0.0
    %112 = vmatpush1.xpose.msra.mxu0 %v72
    %113 = vmatprep.subr.mxu0 0.0
    %114 = vmatpush1.xpose.msra.mxu0 %v75
    %115 = vmatprep.subr.mxu0 0.0
    %116 = vmatpush1.xpose.msra.mxu0 %v78
    %117 = vmatprep.subr.mxu0 0.0
    %118 = vmatpush1.xpose.msra.mxu0 %v81
    %119 = vmatprep.subr.mxu0 0.0
    %120 = vmatpush1.xpose.msra.mxu0 %v84
    %121 = vmatprep.subr.mxu0 0.0
    %122 = vmatpush1.xpose.msra.mxu0 %v87
    %123 = vmatprep.subr.mxu0 0.0
    %124 = vmatpush1.xpose.msra.mxu0 %v90
    %125 = vmatprep.subr.mxu0 0.0
    %126 = vmatpush1.xpose.msra.mxu0 %v93
    %127 = vmatprep.subr.mxu0 0.0
    %128 = vmatpush1.xpose.msra.mxu0 0.0
    %129 = vmatprep.subr.mxu0 0.0
    %130 = vmatpush1.xpose.msra.mxu0 0.0
    %131 = vmatprep.subr.mxu0 0.0
    %132 = vmatpush1.xpose.msra.mxu0 0.0
    %133 = vmatprep.subr.mxu0 0.0
    %134 = vmatpush1.xpose.msra.mxu0 0.0
    %135 = vmatprep.subr.mxu0 0.0
    %136 = vmatpush1.xpose.msra.mxu0 0.0
    %137 = vmatprep.subr.mxu0 0.0
    %138 = vmatpush1.xpose.msra.mxu0 0.0
    %139 = vmatprep.subr.mxu0 0.0
    %140 = vmatpush1.xpose.msra.mxu0 0.0
    %141 = vmatprep.subr.mxu0 0.0
    %142 = vmatpush1.xpose.msra.mxu0 0.0
    %143 = vmatprep.subr.mxu0 0.0
    %144 = vmatpush1.xpose.msra.mxu0 0.0
    %145 = vmatprep.subr.mxu0 0.0
    %146 = vmatpush1.xpose.msra.mxu0 0.0
    %147 = vmatprep.subr.mxu0 0.0
    %148 = vmatpush1.xpose.msra.mxu0 0.0
    %149 = vmatprep.subr.mxu0 0.0
    %150 = vmatpush1.xpose.msra.mxu0 0.0
    %151 = vmatprep.subr.mxu0 0.0
    %152 = vmatpush1.xpose.msra.mxu0 0.0
    %153 = vmatprep.subr.mxu0 0.0
    %154 = vmatpush1.xpose.msra.mxu0 0.0
    %155 = vmatprep.subr.mxu0 0.0
    %156 = vmatpush1.xpose.msra.mxu0 0.0
    %157 = vmatprep.subr.mxu0 0.0
    %158 = vmatpush1.xpose.msra.mxu0 0.0
    %159 = vmatprep.mubr.f32.mxu0 0.0
    %160 = vmatmul.mubr.f32.gmra.mrb[0].mxu0 %v42
    %v161 = vpop.f32.mrb[0].mxu0
    %v162 = vadd.f32 %v38, %v161
    %v163 = vpop.f32.mrb[0].mxu0
    %164 = vmatprep.mubr.f32.mxu0 0.0
    %165 = vmatmul.mubr.f32.gmra.mrb[0].mxu0 %v45
    %v166 = vpop.f32.mrb[0].mxu0
    %v167 = vadd.f32 %v38, %v166
    %v168 = vpop.f32.mrb[0].mxu0
    %169 = vdwg.mxu0
    %170 = vst [vmem:[#allocation2] sm:$0xff] %v162
    %171 = vst [vmem:[#allocation2 + $0x8] sm:$0xff] %v167
    // Predicated region
    $region14: #{tpu_custom_call.1} parent=1 // pred_check
      _
    $region15: #{tpu_custom_call.1} parent=1 // pred_check_branch
      %173 = sbr.rel (0) target = $region17
    $region16: #{tpu_custom_call.1} parent=1 // pred_region
      %s175 = ssub.s32 256, 256
      %176 = vsyncadd [#allocation3], %s175
      %s177 = sshll.u32 [#allocation2], 4
      %s178 = int_to_ptr.vmem [resolvable:$true] %s177
      %183 = dma.vmem_to_hbm [thread:$0]  %s178, 256, %s3, [#allocation3], 128, 128, 8
    $region17: #{tpu_custom_call.1} parent=1 // pred_fallthru
      _
    // Predicated region
    $region18: #{tpu_custom_call.1} parent=1 // pred_check
      _
    $region19: #{tpu_custom_call.1} parent=1 // pred_check_branch
      %185 = sbr.rel (0) target = $region21
    $region20: #{tpu_custom_call.1} parent=1 // pred_region
      %186 = dma.done [#allocation3], 256
    $region21: #{tpu_custom_call.1} parent=1 // pred_fallthru
      _
    %187 = vsyncpa [#allocation3], 1

</llo_original>
